<compile_context>
chip_gen: v5e
topology: v5e:2x2
jax: 0.10.0
libtpu: 0.0.40
codegen_flags: <defaults>
</compile_context>

<pallas_src>
import functools

import jax
import jax.numpy as jnp
from jax.experimental import pallas as pl
from jax.experimental.pallas import tpu as pltpu

EPSILON = 1e-5
_MAX_ROWS = 2048   # sublane rows per tile -> f32 block = 2048*512*4 B = 4 MiB


def _dice_loss_kernel(t_ref, l_ref, inter_ref, denom_ref,
                      inter_acc, denom_acc, *, n_rows, mask_tail):
    """Grid = (batch, n_row_tiles); axis 1 is the reduction axis.

    t_ref, l_ref : (1, tm, lane) tiles of one batch row (any float dtype)
    inter_ref    : (1, 1, 128)  per-batch sum(l*t), scalar broadcast
    denom_ref    : (1, 1, 128)  per-batch sum(l+t), scalar broadcast
    inter_acc    : (acc_rows, lane) f32 folded elementwise accumulator
    denom_acc    : (acc_rows, lane) f32 folded elementwise accumulator
    """
    k = pl.program_id(1)
    tm = t_ref.shape[1]
    lane = t_ref.shape[2]
    acc_rows = inter_acc.shape[0]

    @pl.when(k == 0)
    def _():
        inter_acc[...] = jnp.zeros_like(inter_acc)
        denom_acc[...] = jnp.zeros_like(denom_acc)

    t = t_ref[0].astype(jnp.float32)          # (tm, lane)
    l = l_ref[0].astype(jnp.float32)

    if mask_tail:
        # Last row tile may run past the true row count; zero BOTH inputs so
        # the garbage rows contribute nothing to l*t nor l+t.
        rows = jax.lax.broadcasted_iota(jnp.int32, (tm, lane), 0)
        valid = (k * tm + rows) < n_rows
        zero = jnp.zeros_like(t)
        t = jnp.where(valid, t, zero)
        l = jnp.where(valid, l, zero)

    prod = l * t
    ssum = l + t

    # Fold the tm rows into acc_rows sublane rows with vreg-aligned adds
    # (pure VALU); the cross-lane/sublane XLU reduce happens once, below.
    if tm == acc_rows:
        inter_acc[...] += prod
        denom_acc[...] += ssum
    else:
        inter_acc[...] += prod.reshape(tm // acc_rows, acc_rows, lane).sum(axis=0)
        denom_acc[...] += ssum.reshape(tm // acc_rows, acc_rows, lane).sum(axis=0)

    @pl.when(k == pl.num_programs(1) - 1)
    def _():
        inter = jnp.sum(inter_acc[...])
        denom = jnp.sum(denom_acc[...])
        inter_ref[...] = jnp.broadcast_to(inter, inter_ref.shape)
        denom_ref[...] = jnp.broadcast_to(denom, denom_ref.shape)


def dice_loss(targets, logits, *, max_rows=_MAX_ROWS, epsilon=EPSILON):
    """targets, logits: (B, ...) arrays (e.g. NCHW). Returns f32 scalar loss."""
    assert targets.shape == logits.shape
    batch = targets.shape[0]
    t2 = targets.reshape(batch, -1)
    l2 = logits.reshape(batch, -1)
    n = t2.shape[1]

    # Pick the widest lane in {512, 256, 128} that divides N so the
    # (B, N) -> (B, R, lane) reshape is a free row-major bitcast (no copy).
    lane = next((c for c in (512, 256, 128) if n % c == 0), None)
    if lane is None:
        # TODO(synk): rare ragged-lane case still pays one pad copy; could be
        # removed with flat-index masking on a 2-D layout.
        lane = 128
        n_pad = pl.cdiv(n, lane) * lane
        t2 = jnp.pad(t2, ((0, 0), (0, n_pad - n)))
        l2 = jnp.pad(l2, ((0, 0), (0, n_pad - n)))
        n = n_pad

    n_rows = n // lane
    t3 = t2.reshape(batch, n_rows, lane)
    l3 = l2.reshape(batch, n_rows, lane)

    tm = n_rows if n_rows <= max_rows else max_rows          # full dim or /8 multiple
    n_tiles = pl.cdiv(n_rows, tm)
    mask_tail = (n_rows % tm) != 0                            # ragged last row tile
    acc_rows = 8 if tm % 8 == 0 else tm                      # folded accumulator rows

    kernel = functools.partial(_dice_loss_kernel, n_rows=n_rows, mask_tail=mask_tail)

    inter, denom = pl.pallas_call(
        kernel,
        out_shape=(
            jax.ShapeDtypeStruct((batch, 1, 128), jnp.float32),
            jax.ShapeDtypeStruct((batch, 1, 128), jnp.float32),
        ),
        grid_spec=pltpu.PrefetchScalarGridSpec(
            num_scalar_prefetch=0,
            grid=(batch, n_tiles),
            in_specs=[
                pl.BlockSpec((1, tm, lane), lambda b, k: (b, k, 0)),
                pl.BlockSpec((1, tm, lane), lambda b, k: (b, k, 0)),
            ],
            out_specs=[
                pl.BlockSpec((1, 1, 128), lambda b, k: (b, 0, 0)),
                pl.BlockSpec((1, 1, 128), lambda b, k: (b, 0, 0)),
            ],
            scratch_shapes=[
                pltpu.VMEM((acc_rows, lane), jnp.float32),
                pltpu.VMEM((acc_rows, lane), jnp.float32),
            ],
        ),
        compiler_params=pltpu.CompilerParams(
            dimension_semantics=("parallel", "arbitrary"),
            vmem_limit_bytes=48 * 1024 * 1024,
        ),
    )(t3, l3)

    inter_b = inter[:, 0, 0]
    denom_b = denom[:, 0, 0]
    dice = 2.0 * inter_b / (denom_b + epsilon)
    return jnp.mean(1.0 - dice)


def _dice_loss_ref(targets, logits, epsilon=EPSILON):
    b = targets.shape[0]
    t = targets.reshape(b, -1).astype(jnp.float32)
    l = logits.reshape(b, -1).astype(jnp.float32)
    inter = jnp.sum(l * t, axis=-1)
    dice = 2.0 * inter / (jnp.sum(l + t, axis=-1) + epsilon)
    return jnp.mean(1.0 - dice)


if __name__ == "__main__":
    key = jax.random.PRNGKey(0)
    k1, k2 = jax.random.split(key)

    # Small NCHW shapes: batch=2, channels=4, spatial=16x16
    shape = (2, 4, 16, 16)
    targets_f32 = (jax.random.uniform(k1, shape) > 0.5).astype(jnp.float32)
    logits = jax.random.uniform(k2, shape, dtype=jnp.float32)

    # Binary 0/1 mask -> bf16 is exact and cuts its HBM traffic in half;
    # the kernel widens to f32 for accumulation.
    targets = targets_f32.astype(jnp.bfloat16)

    loss = jax.block_until_ready(dice_loss(targets, logits))
    ref = jax.block_until_ready(_dice_loss_ref(targets_f32, logits))

    assert jnp.allclose(loss, ref, rtol=1e-5, atol=1e-6), (loss, ref)
    print("KERNEL_OK")
</pallas_src>

<mosaic_0001>
module attributes {stable_mosaic.version = 11 : i64} {
  func.func @_dice_loss_kernel(%arg0: i32, %arg1: i32, %arg2: memref<1x2x512xbf16, #tpu.memory_space<vmem>>, %arg3: memref<1x2x512xf32, #tpu.memory_space<vmem>>, %arg4: memref<1x1x128xf32, #tpu.memory_space<vmem>>, %arg5: memref<1x1x128xf32, #tpu.memory_space<vmem>>, %arg6: memref<2x512xf32, #tpu.memory_space<vmem>>, %arg7: memref<2x512xf32, #tpu.memory_space<vmem>>) attributes {dimension_semantics = [#tpu.dimension_semantics<parallel>, #tpu.dimension_semantics<arbitrary>], iteration_bounds = array<i64: 2, 1>, scalar_prefetch = 0 : i64, scratch_operands = 2 : i64, tpu.core_type = #tpu.core_type<tc>, window_params = [{transform_indices = @transform_0, window_bounds = array<i64: 1, 2, 512>}, {transform_indices = @transform_1, window_bounds = array<i64: 1, 2, 512>}, {transform_indices = @transform_2, window_bounds = array<i64: 1, 1, 128>}, {transform_indices = @transform_3, window_bounds = array<i64: 1, 1, 128>}]} {
    %c0_i32 = arith.constant 0 : i32
    %0 = arith.cmpi eq, %arg1, %c0_i32 : i32
    %1 = arith.extui %0 : i1 to i32
    %c0_i32_0 = arith.constant 0 : i32
    %2 = arith.cmpi ne, %1, %c0_i32_0 : i32
    scf.if %2 {
      %cst = arith.constant 0.000000e+00 : f32
      %19 = vector.broadcast %cst : f32 to vector<2x512xf32>
      %c0_16 = arith.constant 0 : index
      %c0_17 = arith.constant 0 : index
      %20 = vector.load %arg6[%c0_16, %c0_17] : memref<2x512xf32, #tpu.memory_space<vmem>>, vector<2x512xf32>
      tpu.vector_store %arg6[%c0_16, %c0_17], %19 {strides = array<i32>} : memref<2x512xf32, #tpu.memory_space<vmem>>, vector<2x512xf32>,
      %cst_18 = arith.constant 0.000000e+00 : f32
      %21 = vector.broadcast %cst_18 : f32 to vector<2x512xf32>
      %c0_19 = arith.constant 0 : index
      %c0_20 = arith.constant 0 : index
      %22 = vector.load %arg7[%c0_19, %c0_20] : memref<2x512xf32, #tpu.memory_space<vmem>>, vector<2x512xf32>
      tpu.vector_store %arg7[%c0_19, %c0_20], %21 {strides = array<i32>} : memref<2x512xf32, #tpu.memory_space<vmem>>, vector<2x512xf32>,
    } else {
    }
    %c0 = arith.constant 0 : index
    %c0_1 = arith.constant 0 : index
    %c0_2 = arith.constant 0 : index
    %3 = vector.load %arg2[%c0, %c0_1, %c0_2] : memref<1x2x512xbf16, #tpu.memory_space<vmem>>, vector<1x2x512xbf16>
    %4 = vector.shape_cast %3 : vector<1x2x512xbf16> to vector<2x512xbf16>
    %5 = arith.extf %4 : vector<2x512xbf16> to vector<2x512xf32>
    %c0_3 = arith.constant 0 : index
    %c0_4 = arith.constant 0 : index
    %c0_5 = arith.constant 0 : index
    %6 = vector.load %arg3[%c0_3, %c0_4, %c0_5] : memref<1x2x512xf32, #tpu.memory_space<vmem>>, vector<1x2x512xf32>
    %7 = vector.shape_cast %6 : vector<1x2x512xf32> to vector<2x512xf32>
    %8 = arith.mulf %7, %5 : vector<2x512xf32>
    %9 = arith.addf %7, %5 : vector<2x512xf32>
    %c0_6 = arith.constant 0 : index
    %c0_7 = arith.constant 0 : index
    %10 = vector.load %arg6[%c0_6, %c0_7] : memref<2x512xf32, #tpu.memory_space<vmem>>, vector<2x512xf32>
    %11 = arith.addf %10, %8 : vector<2x512xf32>
    %c0_8 = arith.constant 0 : index
    %c0_9 = arith.constant 0 : index
    %12 = vector.load %arg6[%c0_8, %c0_9] : memref<2x512xf32, #tpu.memory_space<vmem>>, vector<2x512xf32>
    tpu.vector_store %arg6[%c0_8, %c0_9], %11 {strides = array<i32>} : memref<2x512xf32, #tpu.memory_space<vmem>>, vector<2x512xf32>,
    %c0_10 = arith.constant 0 : index
    %c0_11 = arith.constant 0 : index
    %13 = vector.load %arg7[%c0_10, %c0_11] : memref<2x512xf32, #tpu.memory_space<vmem>>, vector<2x512xf32>
    %14 = arith.addf %13, %9 : vector<2x512xf32>
    %c0_12 = arith.constant 0 : index
    %c0_13 = arith.constant 0 : index
    %15 = vector.load %arg7[%c0_12, %c0_13] : memref<2x512xf32, #tpu.memory_space<vmem>>, vector<2x512xf32>
    tpu.vector_store %arg7[%c0_12, %c0_13], %14 {strides = array<i32>} : memref<2x512xf32, #tpu.memory_space<vmem>>, vector<2x512xf32>,
    %c0_i32_14 = arith.constant 0 : i32
    %16 = arith.cmpi eq, %arg1, %c0_i32_14 : i32
    %17 = arith.extui %16 : i1 to i32
    %c0_i32_15 = arith.constant 0 : i32
    %18 = arith.cmpi ne, %17, %c0_i32_15 : i32
    scf.if %18 {
      %c0_16 = arith.constant 0 : index
      %c0_17 = arith.constant 0 : index
      %19 = vector.load %arg6[%c0_16, %c0_17] : memref<2x512xf32, #tpu.memory_space<vmem>>, vector<2x512xf32>
      %20 = vector.shape_cast %19 : vector<2x512xf32> to vector<1x2x512xf32>
      %cst = arith.constant dense<0.000000e+00> : vector<1xf32>
      %21 = vector.multi_reduction <add>, %20, %cst [1, 2] : vector<1x2x512xf32> to vector<1xf32>
      %22 = vector.shape_cast %21 : vector<1xf32> to vector<1x1x1xf32>
      %23 = vector.extract %22[0, 0, 0] : f32 from vector<1x1x1xf32>
      %c0_18 = arith.constant 0 : index
      %c0_19 = arith.constant 0 : index
      %24 = vector.load %arg7[%c0_18, %c0_19] : memref<2x512xf32, #tpu.memory_space<vmem>>, vector<2x512xf32>
      %25 = vector.shape_cast %24 : vector<2x512xf32> to vector<1x2x512xf32>
      %cst_20 = arith.constant dense<0.000000e+00> : vector<1xf32>
      %26 = vector.multi_reduction <add>, %25, %cst_20 [1, 2] : vector<1x2x512xf32> to vector<1xf32>
      %27 = vector.shape_cast %26 : vector<1xf32> to vector<1x1x1xf32>
      %28 = vector.extract %27[0, 0, 0] : f32 from vector<1x1x1xf32>
      %29 = vector.broadcast %23 : f32 to vector<1x1x128xf32>
      %c0_21 = arith.constant 0 : index
      %c0_22 = arith.constant 0 : index
      %c0_23 = arith.constant 0 : index
      %30 = vector.load %arg4[%c0_21, %c0_22, %c0_23] : memref<1x1x128xf32, #tpu.memory_space<vmem>>, vector<1x1x128xf32>
      tpu.vector_store %arg4[%c0_21, %c0_22, %c0_23], %29 {strides = array<i32>} : memref<1x1x128xf32, #tpu.memory_space<vmem>>, vector<1x1x128xf32>,
      %31 = vector.broadcast %28 : f32 to vector<1x1x128xf32>
      %c0_24 = arith.constant 0 : index
      %c0_25 = arith.constant 0 : index
      %c0_26 = arith.constant 0 : index
      %32 = vector.load %arg5[%c0_24, %c0_25, %c0_26] : memref<1x1x128xf32, #tpu.memory_space<vmem>>, vector<1x1x128xf32>
      tpu.vector_store %arg5[%c0_24, %c0_25, %c0_26], %31 {strides = array<i32>} : memref<1x1x128xf32, #tpu.memory_space<vmem>>, vector<1x1x128xf32>,
    } else {
    }
    return
  }
  func.func @transform_0(%arg0: i32, %arg1: i32) -> (i32, i32, i32) {
    %c0_i32 = arith.constant 0 : i32
    %c0_i32_0 = arith.constant 0 : i32
    return %arg0, %arg1, %c0_i32 : i32, i32, i32
  }
  func.func @transform_1(%arg0: i32, %arg1: i32) -> (i32, i32, i32) {
    %c0_i32 = arith.constant 0 : i32
    %c0_i32_0 = arith.constant 0 : i32
    return %arg0, %arg1, %c0_i32 : i32, i32, i32
  }
  func.func @transform_2(%arg0: i32, %arg1: i32) -> (i32, i32, i32) {
    %c0_i32 = arith.constant 0 : i32
    %c0_i32_0 = arith.constant 0 : i32
    %c0_i32_1 = arith.constant 0 : i32
    return %arg0, %c0_i32, %c0_i32_0 : i32, i32, i32
  }
  func.func @transform_3(%arg0: i32, %arg1: i32) -> (i32, i32, i32) {
    %c0_i32 = arith.constant 0 : i32
    %c0_i32_0 = arith.constant 0 : i32
    %c0_i32_1 = arith.constant 0 : i32
    return %arg0, %c0_i32, %c0_i32_0 : i32, i32, i32
  }
}

</mosaic_0001>

<llo_original>
// kernel: tpu_custom_call.1
$region0: #{tpu_custom_call.1}
  #allocation0 [shape = 'u32[]', space=smem, size = 0x4, offset = 0x4, fixed_abs, tag = 'smem constant byte address 0x4 - core index']
  #allocation1 [shape = 'u32[72,128]{1,0:T(1,128)}', space=vmem, size = 0x9000, scoped, tag = 'internal scratch']
  #allocation2 [shape = 'f32[2,512]{1,0:T(2,128)}', space=vmem, size = 0x1000, scoped, tag = 'scratch operand']
  #allocation3 [shape = 'f32[2,512]{1,0:T(2,128)}', space=vmem, size = 0x1000, scoped, tag = 'scratch operand']
  %s0 = inlined_call_operand.hbm [shape: bf16[2,2,512], index: 0, kind: input, shape index: {}]
  %s1 = inlined_call_operand.hbm [shape: f32[2,2,512], index: 1, kind: input, shape index: {}]
  %s2 = inlined_call_operand.hbm [shape: f32[2,1,128], index: 2, kind: output, shape index: {0}]
  %s3 = inlined_call_operand.hbm [shape: f32[2,1,128], index: 3, kind: output, shape index: {1}]
  %4 = xla_tuple %s2, %s3
  %s5 = sld [smem:[#allocation0]]
  $region65: #{tpu_custom_call.1} parent=0
    _
  %s7 = ssub.s32 1, %s5
  %s8 = scalar_select 0, %s7, %s5
  $region1: #{tpu_custom_call.1} parent=0
    #allocation4 [shape = 'u8[4096]{0}', space=vmem, size = 0x1000, scoped, tag = 'input window, operand 0']
    #allocation5 [shape = 's32[2]{0}', space=sflag, size = 0x8, scoped, tag = 'scoped memory for tpu_custom_call.1']
    #allocation6 [shape = 's32[2]{0}', space=sflag, size = 0x8, scoped, tag = 'scoped memory for tpu_custom_call.1']
    #allocation7 [shape = 'u8[8192]{0}', space=vmem, size = 0x2000, scoped, tag = 'input window, operand 1']
    #allocation8 [shape = 's32[2]{0}', space=sflag, size = 0x8, scoped, tag = 'scoped memory for tpu_custom_call.1']
    #allocation9 [shape = 'u8[1024]{0}', space=vmem, size = 0x400, scoped, tag = 'output window, operand 0']
    #allocation10 [shape = 'u8[1024]{0}', space=vmem, size = 0x400, scoped, tag = 'output window, operand 1']
    #allocation11 [shape = 's32[2]{0}', space=sflag, size = 0x8, scoped, tag = 'scoped memory for tpu_custom_call.1']
    %9 = vsyncpa [#allocation5], 0
    %s10 = scalar_lea.sflag [#allocation5], 1
    %11 = vsyncpa %s10, 0
    %12 = vsyncpa [#allocation8], 0
    %s13 = scalar_lea.sflag [#allocation8], 1
    %14 = vsyncpa %s13, 0
    %15 = vsyncpa [#allocation6], 0
    %s16 = scalar_lea.sflag [#allocation6], 1
    %17 = vsyncpa %s16, 0
    %18 = vsyncpa [#allocation11], 0
    %s19 = scalar_lea.sflag [#allocation11], 1
    %20 = vsyncpa %s19, 0
    loop: start=0, step=1, limit=4
    $region2: #{tpu_custom_call.1} parent=1 // loop_pre_header
      _
    $region3: #{tpu_custom_call.1} parent=1 // loop_header
      %s22 = sphi 0, %s26
      %p23 = scmp.ge.s32.totalorder %s22, 4
      %s29 = sphi 0, %s41
      %s30 = sphi 0, %s37
      %s31 = sphi 0, %s29
      %s32 = sphi 0, %s30
      %s33 = sphi 0, %s31
      %s34 = sphi 0, %s32
      %s46 = sphi 0, %s48
      %s49 = sphi 0, %s46
      %s50 = sphi 0, %s49
      %s66 = sphi 0, %s50
      %s74 = sphi 0, %s76
      %s77 = sphi 0, %s74
      %s78 = sphi 0, %s77
      %s94 = sphi 0, %s78
      %s100 = sphi 0, %s102
      %s103 = sphi 0, %s100
      %s104 = sphi 0, %s103
      %s120 = sphi 0, %s104
      %s126 = sphi 0, %s128
      %s129 = sphi 0, %s126
      %s130 = sphi 0, %s129
      %s146 = sphi 0, %s130
    $region4: #{tpu_custom_call.1} parent=1 // loop_header_branch
      %25 = sbr.rel (%p23) target = $region8
    $region5: #{tpu_custom_call.1} parent=1 // loop_body
      %s27 = ssub.s32 %s22, 1
      %s28 = ssub.s32 %s22, 2
      %s35 = sadd.s32 1, %s30
      %p36 = scmp.ge.s32.totalorder %s35, 1
      %s37 = scalar_select %p36, 0, %s35
      %s38 = sadd.s32 1, %s29
      %s39 = scalar_select %p36, %s38, %s29
      %p40 = scmp.ge.s32.totalorder %s39, 2
      %s41 = scalar_select %p40, 0, %s39
      %s42 = ssub.s32 %s29, %s41
      %s43 = ssub.s32 %s30, %s37
      %s44 = sor.u32 %s42, %s43
      %p45 = scmp.eq.s32.totalorder %s44, 0
      %s47 = sadd.s32 %s46, 1
      %s48 = scalar_select %p45, %s46, %s47
      %p51 = pneg %p45
      %p52 = scmp.eq.s32.totalorder %s22, 1
      %p53 = por %p51, %p52
      %p54 = scmp.ne.s32.totalorder %s46, %s49
      %p55 = scmp.eq.s32.totalorder %s22, 0
      %p56 = por %p54, %p55
      %p57 = scmp.ne.s32.totalorder %s46, %s49
      %p58 = scmp.eq.s32.totalorder %s27, 1
      %p59 = por %p57, %p58
      %p60 = scmp.ne.s32.totalorder %s49, %s50
      %p61 = scmp.eq.s32.totalorder %s27, 0
      %p62 = por %p60, %p61
      %p63 = scmp.ne.s32.totalorder %s49, %s50
      %p64 = scmp.eq.s32.totalorder %s28, 1
      %p65 = por %p63, %p64
      %p67 = scmp.ne.s32.totalorder %s50, %s66
      %p68 = scmp.eq.s32.totalorder %s28, 0
      %p69 = por %p67, %p68
      %s70 = ssub.s32 %s29, %s41
      %s71 = ssub.s32 %s30, %s37
      %s72 = sor.u32 %s70, %s71
      %p73 = scmp.eq.s32.totalorder %s72, 0
      %s75 = sadd.s32 %s74, 1
      %s76 = scalar_select %p73, %s74, %s75
      %p79 = pneg %p73
      %p80 = scmp.eq.s32.totalorder %s22, 1
      %p81 = por %p79, %p80
      %p82 = scmp.ne.s32.totalorder %s74, %s77
      %p83 = scmp.eq.s32.totalorder %s22, 0
      %p84 = por %p82, %p83
      %p85 = scmp.ne.s32.totalorder %s74, %s77
      %p86 = scmp.eq.s32.totalorder %s27, 1
      %p87 = por %p85, %p86
      %p88 = scmp.ne.s32.totalorder %s77, %s78
      %p89 = scmp.eq.s32.totalorder %s27, 0
      %p90 = por %p88, %p89
      %p91 = scmp.ne.s32.totalorder %s77, %s78
      %p92 = scmp.eq.s32.totalorder %s28, 1
      %p93 = por %p91, %p92
      %p95 = scmp.ne.s32.totalorder %s78, %s94
      %p96 = scmp.eq.s32.totalorder %s28, 0
      %p97 = por %p95, %p96
      %s98 = ssub.s32 %s29, %s41
      %p99 = scmp.eq.s32.totalorder %s98, 0
      %s101 = sadd.s32 %s100, 1
      %s102 = scalar_select %p99, %s100, %s101
      %p105 = pneg %p99
      %p106 = scmp.eq.s32.totalorder %s22, 1
      %p107 = por %p105, %p106
      %p108 = scmp.ne.s32.totalorder %s100, %s103
      %p109 = scmp.eq.s32.totalorder %s22, 0
      %p110 = por %p108, %p109
      %p111 = scmp.ne.s32.totalorder %s100, %s103
      %p112 = scmp.eq.s32.totalorder %s27, 1
      %p113 = por %p111, %p112
      %p114 = scmp.ne.s32.totalorder %s103, %s104
      %p115 = scmp.eq.s32.totalorder %s27, 0
      %p116 = por %p114, %p115
      %p117 = scmp.ne.s32.totalorder %s103, %s104
      %p118 = scmp.eq.s32.totalorder %s28, 1
      %p119 = por %p117, %p118
      %p121 = scmp.ne.s32.totalorder %s104, %s120
      %p122 = scmp.eq.s32.totalorder %s28, 0
      %p123 = por %p121, %p122
      %s124 = ssub.s32 %s29, %s41
      %p125 = scmp.eq.s32.totalorder %s124, 0
      %s127 = sadd.s32 %s126, 1
      %s128 = scalar_select %p125, %s126, %s127
      %p131 = pneg %p125
      %p132 = scmp.eq.s32.totalorder %s22, 1
      %p133 = por %p131, %p132
      %p134 = scmp.ne.s32.totalorder %s126, %s129
      %p135 = scmp.eq.s32.totalorder %s22, 0
      %p136 = por %p134, %p135
      %p137 = scmp.ne.s32.totalorder %s126, %s129
      %p138 = scmp.eq.s32.totalorder %s27, 1
      %p139 = por %p137, %p138
      %p140 = scmp.ne.s32.totalorder %s129, %s130
      %p141 = scmp.eq.s32.totalorder %s27, 0
      %p142 = por %p140, %p141
      %p143 = scmp.ne.s32.totalorder %s129, %s130
      %p144 = scmp.eq.s32.totalorder %s28, 1
      %p145 = por %p143, %p144
      %p147 = scmp.ne.s32.totalorder %s130, %s146
      %p148 = scmp.eq.s32.totalorder %s28, 0
      %p149 = por %p147, %p148
      %p150 = scmp.le.s32.totalorder 1, %s22
      %p151 = scmp.lt.s32.totalorder %s22, 3
      %p152 = pnand %p150, %p151
      %p153 = pneg %p152
      // Predicated region
      $region9: #{tpu_custom_call.1} parent=5 // pred_check
        _
      $region10: #{tpu_custom_call.1} parent=5 // pred_check_branch
        %155 = sbr.rel (%p152) target = $region12
      $region11: #{tpu_custom_call.1} parent=5 // pred_region
        %s156 = ssub.s32 %s22, 1
      $region12: #{tpu_custom_call.1} parent=5 // pred_fallthru
        _
      %p157 = scmp.lt.s32.totalorder %s22, 2
      // Predicated region
      $region13: #{tpu_custom_call.1} parent=5 // pred_check
        %p158 = pneg %p157
      $region14: #{tpu_custom_call.1} parent=5 // pred_check_branch
        %160 = sbr.rel (%p158) target = $region16
      $region15: #{tpu_custom_call.1} parent=5 // pred_region
        // Predicated region
        $region17: #{tpu_custom_call.1} parent=15 // pred_check
          %p161 = pneg %p56
        $region18: #{tpu_custom_call.1} parent=15 // pred_check_branch
          %163 = sbr.rel (%p161) target = $region20
        $region19: #{tpu_custom_call.1} parent=15 // pred_region
          %s164 = sand.u32 %s46, 1
          %s165 = scalar_lea.sflag [#allocation5], %s164
          %s166 = sand.u32 %s46, 1
          %s167 = smul.addr %s166, 4
          %s168 = scalar_lea.vmem [#allocation4], %s167
          %170 = vsyncadd %s165, 0
          %s171 = smul.addr %s30, 4
          %s172 = smul.addr %s29, 4
          %s173 = sadd.s32 %s171, %s172
          %s174 = scalar_lea.hbm %s0, %s173
          %s176 = sshll.u32 %s174, 4
          %s177 = int_to_ptr.hbm [resolvable:$true] %s176
          %s178 = sshll.u32 %s168, 4
          %s179 = int_to_ptr.vmem [resolvable:$true] %s178
          %181 = dma.hbm_to_vmem [thread:$0]  %s177, 64, %s179, %s165
        $region20: #{tpu_custom_call.1} parent=15 // pred_fallthru
          _
        // Predicated region
        $region21: #{tpu_custom_call.1} parent=15 // pred_check
          %p182 = pneg %p84
        $region22: #{tpu_custom_call.1} parent=15 // pred_check_branch
          %184 = sbr.rel (%p182) target = $region24
        $region23: #{tpu_custom_call.1} parent=15 // pred_region
          %s185 = sand.u32 %s74, 1
          %s186 = scalar_lea.sflag [#allocation8], %s185
          %s187 = sand.u32 %s74, 1
          %s188 = smul.addr %s187, 8
          %s189 = scalar_lea.vmem [#allocation7], %s188
          %191 = vsyncadd %s186, 0
          %s192 = smul.addr %s30, 4
          %s193 = smul.addr %s29, 4
          %s194 = sadd.s32 %s192, %s193
          %s195 = smul.addr %s194, 2
          %s196 = scalar_lea.hbm %s1, %s195
          %s198 = sshll.u32 %s196, 4
          %s199 = int_to_ptr.hbm [resolvable:$true] %s198
          %s200 = sshll.u32 %s189, 4
          %s201 = int_to_ptr.vmem [resolvable:$true] %s200
          %203 = dma.hbm_to_vmem [thread:$0]  %s199, 128, %s201, %s186
        $region24: #{tpu_custom_call.1} parent=15 // pred_fallthru
          _
      $region16: #{tpu_custom_call.1} parent=5 // pred_fallthru
        _
      %p204 = scmp.le.s32.totalorder 1, %s22
      %p205 = scmp.lt.s32.totalorder %s22, 3
      %p206 = pnand %p204, %p205
      %p207 = pneg %p206
      // Predicated region
      $region25: #{tpu_custom_call.1} parent=5 // pred_check
        _
      $region26: #{tpu_custom_call.1} parent=5 // pred_check_branch
        %209 = sbr.rel (%p206) target = $region28
      $region27: #{tpu_custom_call.1} parent=5 // pred_region
        %s210 = ssub.s32 %s22, 1
        %s211 = sand.u32 %s49, 1
        %s212 = scalar_lea.sflag [#allocation5], %s211
        %s213 = sand.u32 %s49, 1
        %s214 = smul.addr %s213, 4
        %s215 = scalar_lea.vmem [#allocation4], %s214
        // Predicated region
        $region29: #{tpu_custom_call.1} parent=27 // pred_check
          %p216 = pneg %p62
        $region30: #{tpu_custom_call.1} parent=27 // pred_check_branch
          %218 = sbr.rel (%p216) target = $region32
        $region31: #{tpu_custom_call.1} parent=27 // pred_region
          %220 = dma.done %s212, 64
        $region32: #{tpu_custom_call.1} parent=27 // pred_fallthru
          _
        %s221 = sand.u32 %s77, 1
        %s222 = scalar_lea.sflag [#allocation8], %s221
        %s223 = sand.u32 %s77, 1
        %s224 = smul.addr %s223, 8
        %s225 = scalar_lea.vmem [#allocation7], %s224
        // Predicated region
        $region33: #{tpu_custom_call.1} parent=27 // pred_check
          %p226 = pneg %p90
        $region34: #{tpu_custom_call.1} parent=27 // pred_check_branch
          %228 = sbr.rel (%p226) target = $region36
        $region35: #{tpu_custom_call.1} parent=27 // pred_region
          %230 = dma.done %s222, 128
        $region36: #{tpu_custom_call.1} parent=27 // pred_fallthru
          _
        %s231 = sand.u32 %s49, 1
        %s232 = scalar_lea.sflag [#allocation5], %s231
        %s233 = sand.u32 %s49, 1
        %s234 = smul.addr %s233, 4
        %s235 = scalar_lea.vmem [#allocation4], %s234
        %p236 = pneg %p62
        %p237 = pneg %p59
        %s238 = sand.u32 %s77, 1
        %s239 = scalar_lea.sflag [#allocation8], %s238
        %s240 = sand.u32 %s77, 1
        %s241 = smul.addr %s240, 8
        %s242 = scalar_lea.vmem [#allocation7], %s241
        %p243 = pneg %p90
        %p244 = pneg %p87
        %p245 = pneg %p116
        %p246 = pneg %p113
        %s247 = sand.u32 %s103, 1
        %s248 = scalar_lea.sflag [#allocation6], %s247
        %s249 = sand.u32 %s103, 1
        %s250 = scalar_lea.vmem [#allocation9], %s249
        %p251 = pneg %p142
        %p252 = pneg %p139
        %s253 = sand.u32 %s129, 1
        %s254 = scalar_lea.sflag [#allocation11], %s253
        %s255 = sand.u32 %s129, 1
        %s256 = scalar_lea.vmem [#allocation10], %s255
        %p257 = scmp.eq.s32.totalorder %s32, 0
        // Predicated region
        $region37: #{tpu_custom_call.1} parent=27 // pred_check
          %p258 = pneg %p257
        $region38: #{tpu_custom_call.1} parent=27 // pred_check_branch
          %260 = sbr.rel (%p258) target = $region40
        $region39: #{tpu_custom_call.1} parent=27 // pred_region
          %261 = vst [vmem:[#allocation2] sm:$0xff] 0.0
          %262 = vst [vmem:[#allocation3] sm:$0xff] 0.0
        $region40: #{tpu_custom_call.1} parent=27 // pred_fallthru
          _
        %v263 = vld [vmem:[%s215] sm:$0xf]
        %v264 = vunpack.c.l.bf16 %v263
        %v265 = vld [vmem:[%s225] sm:$0xff]
        %v266 = vmul.f32 %v265, %v264
        %v267 = vadd.f32 %v265, %v264
        %v268 = vld [vmem:[#allocation2] sm:$0xff]
        %v269 = vadd.f32 %v268, %v266
        %270 = vst [vmem:[#allocation2] sm:$0xff] %v269
        %v271 = vld [vmem:[#allocation3] sm:$0xff]
        %v272 = vadd.f32 %v271, %v267
        %273 = vst [vmem:[#allocation3] sm:$0xff] %v272
        // Predicated region
        $region41: #{tpu_custom_call.1} parent=27 // pred_check
          %p274 = pneg %p257
        $region42: #{tpu_custom_call.1} parent=27 // pred_check_branch
          %276 = sbr.rel (%p274) target = $region44
        $region43: #{tpu_custom_call.1} parent=27 // pred_region
          %v277 = vld [vmem:[#allocation2] sm:$0xff]
          %279 = vst [vmem:[#allocation1] ss:$4 sm:$0xff] %v277
          %v280 = vld.sshfl [vmem:[#allocation1] sm:$0xff pattern:$0x73625140]
          %v281 = vld.sshfl [vmem:[#allocation1 + $0x8] sm:$0xff pattern:$0x73625140]
          %v282 = vld.sshfl [vmem:[#allocation1 + $0x10] sm:$0xff pattern:$0x73625140]
          %v283 = vld.sshfl [vmem:[#allocation1 + $0x18] sm:$0xff pattern:$0x73625140]
          %vm288 = vcmask 1041408
          %v289 = vsel %vm288, %v280, 0.0
          %v290 = vsel %vm288, %v281, 0.0
          %v291 = vadd.f32 %v289, %v290
          %v292 = vsel %vm288, %v282, 0.0
          %v293 = vadd.f32 %v291, %v292
          %v294 = vsel %vm288, %v283, 0.0
          %v295 = vadd.f32 %v293, %v294
          %296 = vadd.xlane.f32.xlu0 %v295
          %v297 = vpop.xlane.xlu0 %296
          %v298 = vrot.slane %v297, 4
          %v299 = vadd.f32 %v297, %v298
          %v300 = vrot.slane %v299, 2
          %v301 = vadd.f32 %v299, %v300
          %v302 = vrot.slane %v301, 1
          %v303 = vadd.f32 %v301, %v302
          %s304 = vtos %v303
          %v305 = vld [vmem:[#allocation3] sm:$0xff]
          %307 = vst [vmem:[#allocation1] ss:$4 sm:$0xff] %v305
          %v308 = vld.sshfl [vmem:[#allocation1] sm:$0xff pattern:$0x73625140]
          %v309 = vld.sshfl [vmem:[#allocation1 + $0x8] sm:$0xff pattern:$0x73625140]
          %v310 = vld.sshfl [vmem:[#allocation1 + $0x10] sm:$0xff pattern:$0x73625140]
          %v311 = vld.sshfl [vmem:[#allocation1 + $0x18] sm:$0xff pattern:$0x73625140]
          %v316 = vsel %vm288, %v308, 0.0
          %v317 = vsel %vm288, %v309, 0.0
          %v318 = vadd.f32 %v316, %v317
          %v319 = vsel %vm288, %v310, 0.0
          %v320 = vadd.f32 %v318, %v319
          %v321 = vsel %vm288, %v311, 0.0
          %v322 = vadd.f32 %v320, %v321
          %323 = vadd.xlane.f32.xlu0 %v322
          %v324 = vpop.xlane.xlu0 %323
          %v325 = vrot.slane %v324, 4
          %v326 = vadd.f32 %v324, %v325
          %v327 = vrot.slane %v326, 2
          %v328 = vadd.f32 %v326, %v327
          %v329 = vrot.slane %v328, 1
          %v330 = vadd.f32 %v328, %v329
          %s331 = vtos %v330
          %v332 = vstv %s304
          %333 = vst [vmem:[%s250] sm:$0x1] %v332
          %v334 = vstv %s331
          %335 = vst [vmem:[%s256] sm:$0x1] %v334
        $region44: #{tpu_custom_call.1} parent=27 // pred_fallthru
          _
        %s336 = sand.u32 %s103, 1
        %s337 = scalar_lea.sflag [#allocation6], %s336
        %s338 = sand.u32 %s103, 1
        %s339 = scalar_lea.vmem [#allocation9], %s338
        %s340 = sand.u32 %s129, 1
        %s341 = scalar_lea.sflag [#allocation11], %s340
        %s342 = sand.u32 %s129, 1
        %s343 = scalar_lea.vmem [#allocation10], %s342
        // Predicated region
        $region45: #{tpu_custom_call.1} parent=27 // pred_check
          %p344 = pneg %p113
        $region46: #{tpu_custom_call.1} parent=27 // pred_check_branch
          %346 = sbr.rel (%p344) target = $region48
        $region47: #{tpu_custom_call.1} parent=27 // pred_region
          %348 = vsyncadd %s337, 0
          %s349 = scalar_lea.hbm %s2, %s31
          %s351 = sshll.u32 %s339, 4
          %s352 = int_to_ptr.vmem [resolvable:$true] %s351
          %s353 = sshll.u32 %s349, 4
          %s354 = int_to_ptr.hbm [resolvable:$true] %s353
          %356 = dma.vmem_to_hbm [thread:$0]  %s352, 16, %s354, %s337
        $region48: #{tpu_custom_call.1} parent=27 // pred_fallthru
          _
        // Predicated region
        $region49: #{tpu_custom_call.1} parent=27 // pred_check
          %p357 = pneg %p139
        $region50: #{tpu_custom_call.1} parent=27 // pred_check_branch
          %359 = sbr.rel (%p357) target = $region52
        $region51: #{tpu_custom_call.1} parent=27 // pred_region
          %361 = vsyncadd %s341, 0
          %s362 = scalar_lea.hbm %s3, %s31
          %s364 = sshll.u32 %s343, 4
          %s365 = int_to_ptr.vmem [resolvable:$true] %s364
          %s366 = sshll.u32 %s362, 4
          %s367 = int_to_ptr.hbm [resolvable:$true] %s366
          %369 = dma.vmem_to_hbm [thread:$0]  %s365, 16, %s367, %s341
        $region52: #{tpu_custom_call.1} parent=27 // pred_fallthru
          _
      $region28: #{tpu_custom_call.1} parent=5 // pred_fallthru
        _
      %p370 = scmp.le.s32.totalorder 2, %s22
      // Predicated region
      $region53: #{tpu_custom_call.1} parent=5 // pred_check
        %p371 = pneg %p370
      $region54: #{tpu_custom_call.1} parent=5 // pred_check_branch
        %373 = sbr.rel (%p371) target = $region56
      $region55: #{tpu_custom_call.1} parent=5 // pred_region
        %s374 = ssub.s32 %s22, 2
        // Predicated region
        $region57: #{tpu_custom_call.1} parent=55 // pred_check
          %p375 = pneg %p119
        $region58: #{tpu_custom_call.1} parent=55 // pred_check_branch
          %377 = sbr.rel (%p375) target = $region60
        $region59: #{tpu_custom_call.1} parent=55 // pred_region
          %s378 = sand.u32 %s104, 1
          %s379 = scalar_lea.sflag [#allocation6], %s378
          %s380 = sand.u32 %s104, 1
          %s381 = scalar_lea.vmem [#allocation9], %s380
          %383 = dma.done %s379, 16
        $region60: #{tpu_custom_call.1} parent=55 // pred_fallthru
          _
        // Predicated region
        $region61: #{tpu_custom_call.1} parent=55 // pred_check
          %p384 = pneg %p145
        $region62: #{tpu_custom_call.1} parent=55 // pred_check_branch
          %386 = sbr.rel (%p384) target = $region64
        $region63: #{tpu_custom_call.1} parent=55 // pred_region
          %s387 = sand.u32 %s130, 1
          %s388 = scalar_lea.sflag [#allocation11], %s387
          %s389 = sand.u32 %s130, 1
          %s390 = scalar_lea.vmem [#allocation10], %s389
          %392 = dma.done %s388, 16
        $region64: #{tpu_custom_call.1} parent=55 // pred_fallthru
          _
      $region56: #{tpu_custom_call.1} parent=5 // pred_fallthru
        _
    $region6: #{tpu_custom_call.1} parent=1 // loop_footer
      %s26 = sadd.s32 1, %s22
    $region7: #{tpu_custom_call.1} parent=1 // loop_footer_branch
      %21 = sbr.rel target = $region3
    $region8: #{tpu_custom_call.1} parent=1 // loop_exit
      _
    %393 = vsyncpa [#allocation5], 1
    %s394 = scalar_lea.sflag [#allocation5], 1
    %395 = vsyncpa %s394, 1
    %396 = vsyncpa [#allocation8], 1
    %s397 = scalar_lea.sflag [#allocation8], 1
    %398 = vsyncpa %s397, 1
    %399 = vsyncpa [#allocation6], 1
    %s400 = scalar_lea.sflag [#allocation6], 1
    %401 = vsyncpa %s400, 1
    %402 = vsyncpa [#allocation11], 1
    %s403 = scalar_lea.sflag [#allocation11], 1
    %404 = vsyncpa %s403, 1

</llo_original>
